<compile_context>
chip_gen: v5e
topology: v5e:2x2
jax: 0.10.0
libtpu: 0.0.40
codegen_flags: <defaults>
</compile_context>

<pallas_src>
import functools

import jax
import jax.numpy as jnp
from jax.experimental import pallas as pl
from jax.experimental.pallas import tpu as pltpu

LN_EPS = 1e-5  # torch.nn.LayerNorm default


def _round_up(n, m):
    return ((n + m - 1) // m) * m


# ------------------------------ fused kernel ------------------------------- #
def decoder_kernel(x_ref, w_ref, v_ref, fw_ref, fb_ref, o_ref, *, f_true, f_pad):
    """Whole decoder in one invocation; all refs are fully VMEM-resident.

    x:   [Bp, Fp]        bf16 activation (padded)
    w:   [L, Fp, 3*Fp]   bf16, per layer [w1 | ws | w2] (lane-aligned slices)
    v:   [L, 4, Fp]      f32,  rows = b1, (b2 + bs), gamma, beta
    fw:  [Fp, Fp]        bf16 final-linear weight
    fb:  [1, Fp]         f32  final-linear bias
    o:   [Bp, Fp]        f32 output (written once)
    Precondition: all padding (rows/cols beyond true sizes) is zero-initialized.
    """
    num_layers = w_ref.shape[0]

    # Feature mask for LayerNorm statistics, hoisted out of the layer loop.
    col = jax.lax.broadcasted_iota(jnp.int32, (1, f_pad), 1)
    mask = (col < f_true).astype(jnp.float32)
    inv_n = 1.0 / float(f_true)

    x = x_ref[...]                                      # bf16 [Bp, Fp]
    for l in range(num_layers):                         # static, fully unrolled
        w = w_ref[l]                                    # bf16 [Fp, 3*Fp]
        v = v_ref[l]                                    # f32  [4, Fp]

        # Single MXU push for both matmuls that share x: [x@w1 | x@ws].
        hw = jnp.dot(x, w[:, : 2 * f_pad], preferred_element_type=jnp.float32)
        h = jnp.maximum(hw[:, :f_pad] + v[0:1], 0.0)    # relu(linear1(x))
        residual = hw[:, f_pad:]                        # shortcut(x); bias folded into v[1]

        # dropout(p=0.5) == identity in eval-mode forward
        out = (jnp.dot(h.astype(jnp.bfloat16), w[:, 2 * f_pad:],
                       preferred_element_type=jnp.float32)
               + v[1:2] + residual)

        # LayerNorm over the true feature count.  Padded lanes of `out` are
        # exactly zero by construction, so no mask is needed on the mean.
        mean = jnp.sum(out, axis=-1, keepdims=True) * inv_n
        centered = (out - mean) * mask
        var = jnp.sum(centered * centered, axis=-1, keepdims=True) * inv_n
        normed = centered * jax.lax.rsqrt(var + LN_EPS)
        x = (normed * v[2:3] + v[3:4]).astype(jnp.bfloat16)   # padded lanes stay zero

    # Final Linear.
    o_ref[...] = (jnp.dot(x, fw_ref[...], preferred_element_type=jnp.float32)
                  + fb_ref[...]).astype(o_ref.dtype)


# --------------------------------- wrapper ---------------------------------- #
@functools.partial(jax.jit, static_argnames=("input_size", "output_dim"))
def decoder_forward(x, w_packed, v_packed, fw, fb, *, input_size, output_dim):
    batch = x.shape[0]
    f_pad = fw.shape[-1]
    b_pad = _round_up(batch, 16)            # bf16 sublane packing

    x_pad = (jnp.zeros((b_pad, f_pad), jnp.float32)
             .at[:batch, :input_size].set(x)
             .astype(jnp.bfloat16))

    # Explicit VMEM budget for the fully-resident variant (v7x: 64 MiB physical,
    # 32 MiB default scoped; v5e: 16 MiB default scoped).
    resident_bytes = sum(int(a.size) * a.dtype.itemsize
                         for a in (x_pad, w_packed, v_packed, fw, fb))
    resident_bytes += b_pad * f_pad * 4     # f32 output block
    vmem_limit = int(min(64 * 2**20,
                         max(16 * 2**20, 2 * resident_bytes + (1 << 20))))

    kernel = functools.partial(decoder_kernel, f_true=output_dim, f_pad=f_pad)
    out = pl.pallas_call(
        kernel,
        out_shape=jax.ShapeDtypeStruct((b_pad, f_pad), jnp.float32),
        compiler_params=pltpu.CompilerParams(vmem_limit_bytes=vmem_limit),
    )(x_pad, w_packed, v_packed, fw, fb)
    return out[:batch, :output_dim]


# --------------------------- parameter creation ----------------------------- #
def make_linear_params(key, fan_in, fan_out):
    """Mimics torch.nn.Linear init (uniform +-1/sqrt(fan_in)); weight stored as (in, out)."""
    kw, kb = jax.random.split(key)
    bound = 1.0 / (fan_in ** 0.5)
    w = jax.random.uniform(kw, (fan_in, fan_out), jnp.float32, -bound, bound)
    b = jax.random.uniform(kb, (1, fan_out), jnp.float32, -bound, bound)
    return w, b


def make_decoder_params(key, input_size, num_layers, output_dim):
    block_params = []
    for i in range(num_layers):
        fin = input_size if i == 0 else output_dim
        key, k1, k2, k3 = jax.random.split(key, 4)
        w1, b1 = make_linear_params(k1, fin, output_dim)
        w2, b2 = make_linear_params(k2, output_dim, output_dim)
        ws, bs = make_linear_params(k3, fin, output_dim)
        block_params.append({
            "w1": w1, "b1": b1, "w2": w2, "b2": b2, "ws": ws, "bs": bs,
            "gamma": jnp.ones((1, output_dim), jnp.float32),
            "beta": jnp.zeros((1, output_dim), jnp.float32),
        })
    key, kf = jax.random.split(key)
    fw, fb = make_linear_params(kf, output_dim, output_dim)
    return block_params, fw, fb


def pack_decoder_params(block_params, fw, fb, input_size, output_dim):
    """Zero-pad features to a multiple of 128 and coalesce per-layer params:
    one bf16 weight slab [L, Fp, 3Fp] = [w1 | ws | w2] (shortcut bias folded
    into b2) and one f32 vector slab [L, 4, Fp] = (b1, b2+bs, gamma, beta).
    All padding must remain zero (the kernel's LayerNorm relies on it)."""
    f_pad = _round_up(max(input_size, output_dim), 128)
    L = len(block_params)
    W = jnp.zeros((L, f_pad, 3 * f_pad), jnp.float32)
    V = jnp.zeros((L, 4, f_pad), jnp.float32)
    for i, p in enumerate(block_params):
        fin = p["w1"].shape[0]
        W = W.at[i, :fin, :output_dim].set(p["w1"])
        W = W.at[i, :fin, f_pad:f_pad + output_dim].set(p["ws"])
        W = W.at[i, :output_dim, 2 * f_pad:2 * f_pad + output_dim].set(p["w2"])
        V = V.at[i, 0, :output_dim].set(p["b1"][0])
        V = V.at[i, 1, :output_dim].set((p["b2"] + p["bs"])[0])
        V = V.at[i, 2, :output_dim].set(p["gamma"][0])
        V = V.at[i, 3, :output_dim].set(p["beta"][0])
    fw_p = jnp.zeros((f_pad, f_pad), jnp.float32).at[:output_dim, :output_dim].set(fw)
    fb_p = jnp.zeros((1, f_pad), jnp.float32).at[:, :output_dim].set(fb)
    return W.astype(jnp.bfloat16), V, fw_p.astype(jnp.bfloat16), fb_p


# ----------------------------- reference (JAX) ------------------------------ #
def decoder_reference(x, block_params, final_w, final_b):
    for p in block_params:
        residual = x @ p["ws"] + p["bs"]
        h = jnp.maximum(x @ p["w1"] + p["b1"], 0.0)
        out = h @ p["w2"] + p["b2"] + residual
        mean = jnp.mean(out, axis=-1, keepdims=True)
        var = jnp.mean((out - mean) ** 2, axis=-1, keepdims=True)
        x = (out - mean) * jax.lax.rsqrt(var + LN_EPS) * p["gamma"] + p["beta"]
    return x @ final_w + final_b


# ---------------------------------- main ------------------------------------ #
if __name__ == "__main__":
    batch = 8
    input_size = 32
    num_layers = 2
    output_dim = 32

    key = jax.random.PRNGKey(0)
    key, kx, kp = jax.random.split(key, 3)
    x = jax.random.normal(kx, (batch, input_size), jnp.float32)
    block_params, final_w, final_b = make_decoder_params(
        kp, input_size, num_layers, output_dim)

    packed = pack_decoder_params(block_params, final_w, final_b,
                                 input_size, output_dim)
    out = decoder_forward(x, *packed, input_size=input_size, output_dim=output_dim)
    out = jax.block_until_ready(out)

    ref = decoder_reference(x, block_params, final_w, final_b)
    assert out.shape == (batch, output_dim)
    # Tolerance loosened vs the pure-f32 version: weights/activations are bf16
    # on the MXU (LayerNorm stats and accumulation remain f32).
    assert jnp.allclose(out, ref, atol=5e-2, rtol=5e-2), "mismatch vs reference"

    print("KERNEL_OK")
</pallas_src>

<mosaic_0001>
module attributes {stable_mosaic.version = 11 : i64} {
  func.func @decoder_kernel(%arg0: memref<16x128xbf16, #tpu.memory_space<vmem>>, %arg1: memref<2x128x384xbf16, #tpu.memory_space<vmem>>, %arg2: memref<2x4x128xf32, #tpu.memory_space<vmem>>, %arg3: memref<128x128xbf16, #tpu.memory_space<vmem>>, %arg4: memref<1x128xf32, #tpu.memory_space<vmem>>, %arg5: memref<16x128xf32, #tpu.memory_space<vmem>>) attributes {dimension_semantics = [], scalar_prefetch = 0 : i64, scratch_operands = 0 : i64, tpu.core_type = #tpu.core_type<tc>} {
    %0 = tpu.iota {dimensions = array<i32: 1>} : vector<1x128xi32>
    %c32_i32 = arith.constant 32 : i32
    %1 = vector.broadcast %c32_i32 : i32 to vector<1x128xi32>
    %2 = arith.cmpi slt, %0, %1 : vector<1x128xi32>
    %3 = arith.extui %2 : vector<1x128xi1> to vector<1x128xi32>
    %4 = arith.sitofp %3 : vector<1x128xi32> to vector<1x128xf32>
    %c0 = arith.constant 0 : index
    %c0_0 = arith.constant 0 : index
    %5 = vector.load %arg0[%c0, %c0_0] : memref<16x128xbf16, #tpu.memory_space<vmem>>, vector<16x128xbf16>
    %c0_1 = arith.constant 0 : index
    %c0_2 = arith.constant 0 : index
    %c0_3 = arith.constant 0 : index
    %6 = vector.load %arg1[%c0_1, %c0_2, %c0_3] : memref<2x128x384xbf16, #tpu.memory_space<vmem>>, vector<1x128x384xbf16>
    %7 = vector.shape_cast %6 : vector<1x128x384xbf16> to vector<128x384xbf16>
    %c0_4 = arith.constant 0 : index
    %c0_5 = arith.constant 0 : index
    %c0_6 = arith.constant 0 : index
    %8 = vector.load %arg2[%c0_4, %c0_5, %c0_6] : memref<2x4x128xf32, #tpu.memory_space<vmem>>, vector<1x4x128xf32>
    %9 = vector.shape_cast %8 : vector<1x4x128xf32> to vector<4x128xf32>
    %10 = vector.extract_strided_slice %7 {offsets = [0, 0], sizes = [128, 256], strides = [1, 1]} : vector<128x384xbf16> to vector<128x256xbf16>
    %cst = arith.constant dense<0.000000e+00> : vector<16x256xf32>
    %11 = tpu.matmul %5, %10, %cst {dimension_numbers = #tpu.dot_dimension_numbers<[1], [0], [0], [1], [0, 0, 1, 1], [], []>} : vector<16x128xbf16>, vector<128x256xbf16>, vector<16x256xf32> -> vector<16x256xf32>
    %12 = vector.extract_strided_slice %11 {offsets = [0, 0], sizes = [16, 128], strides = [1, 1]} : vector<16x256xf32> to vector<16x128xf32>
    %13 = vector.extract_strided_slice %9 {offsets = [0, 0], sizes = [1, 128], strides = [1, 1]} : vector<4x128xf32> to vector<1x128xf32>
    %14 = vector.broadcast %13 : vector<1x128xf32> to vector<16x128xf32>
    %15 = arith.addf %12, %14 : vector<16x128xf32>
    %cst_7 = arith.constant 0.000000e+00 : f32
    %16 = vector.broadcast %cst_7 : f32 to vector<16x128xf32>
    %17 = arith.maximumf %15, %16 : vector<16x128xf32>
    %18 = vector.extract_strided_slice %11 {offsets = [0, 128], sizes = [16, 128], strides = [1, 1]} : vector<16x256xf32> to vector<16x128xf32>
    %19 = arith.truncf %17 : vector<16x128xf32> to vector<16x128xbf16>
    %20 = vector.extract_strided_slice %7 {offsets = [0, 256], sizes = [128, 128], strides = [1, 1]} : vector<128x384xbf16> to vector<128x128xbf16>
    %cst_8 = arith.constant dense<0.000000e+00> : vector<16x128xf32>
    %21 = tpu.matmul %19, %20, %cst_8 {dimension_numbers = #tpu.dot_dimension_numbers<[1], [0], [0], [1], [0, 0, 1, 1], [], []>} : vector<16x128xbf16>, vector<128x128xbf16>, vector<16x128xf32> -> vector<16x128xf32>
    %22 = vector.extract_strided_slice %9 {offsets = [1, 0], sizes = [1, 128], strides = [1, 1]} : vector<4x128xf32> to vector<1x128xf32>
    %23 = vector.broadcast %22 : vector<1x128xf32> to vector<16x128xf32>
    %24 = arith.addf %21, %23 : vector<16x128xf32>
    %25 = arith.addf %24, %18 : vector<16x128xf32>
    %cst_9 = arith.constant dense<0.000000e+00> : vector<16xf32>
    %26 = vector.multi_reduction <add>, %25, %cst_9 [1] : vector<16x128xf32> to vector<16xf32>
    %27 = vector.shape_cast %26 : vector<16xf32> to vector<16x1xf32>
    %cst_10 = arith.constant 3.125000e-02 : f32
    %28 = vector.broadcast %cst_10 : f32 to vector<16x1xf32>
    %29 = arith.mulf %27, %28 : vector<16x1xf32>
    %30 = vector.broadcast %29 : vector<16x1xf32> to vector<16x128xf32>
    %31 = arith.subf %25, %30 : vector<16x128xf32>
    %32 = vector.broadcast %4 : vector<1x128xf32> to vector<16x128xf32>
    %33 = arith.mulf %31, %32 : vector<16x128xf32>
    %34 = arith.mulf %33, %33 : vector<16x128xf32>
    %cst_11 = arith.constant dense<0.000000e+00> : vector<16xf32>
    %35 = vector.multi_reduction <add>, %34, %cst_11 [1] : vector<16x128xf32> to vector<16xf32>
    %36 = vector.shape_cast %35 : vector<16xf32> to vector<16x1xf32>
    %cst_12 = arith.constant 3.125000e-02 : f32
    %37 = vector.broadcast %cst_12 : f32 to vector<16x1xf32>
    %38 = arith.mulf %36, %37 : vector<16x1xf32>
    %cst_13 = arith.constant 9.99999974E-6 : f32
    %39 = vector.broadcast %cst_13 : f32 to vector<16x1xf32>
    %40 = arith.addf %38, %39 : vector<16x1xf32>
    %41 = math.rsqrt %40 : vector<16x1xf32>
    %42 = vector.broadcast %41 : vector<16x1xf32> to vector<16x128xf32>
    %43 = arith.mulf %33, %42 : vector<16x128xf32>
    %44 = vector.extract_strided_slice %9 {offsets = [2, 0], sizes = [1, 128], strides = [1, 1]} : vector<4x128xf32> to vector<1x128xf32>
    %45 = vector.broadcast %44 : vector<1x128xf32> to vector<16x128xf32>
    %46 = arith.mulf %43, %45 : vector<16x128xf32>
    %47 = vector.extract_strided_slice %9 {offsets = [3, 0], sizes = [1, 128], strides = [1, 1]} : vector<4x128xf32> to vector<1x128xf32>
    %48 = vector.broadcast %47 : vector<1x128xf32> to vector<16x128xf32>
    %49 = arith.addf %46, %48 : vector<16x128xf32>
    %50 = arith.truncf %49 : vector<16x128xf32> to vector<16x128xbf16>
    %c1 = arith.constant 1 : index
    %c0_14 = arith.constant 0 : index
    %c0_15 = arith.constant 0 : index
    %51 = vector.load %arg1[%c1, %c0_14, %c0_15] : memref<2x128x384xbf16, #tpu.memory_space<vmem>>, vector<1x128x384xbf16>
    %52 = vector.shape_cast %51 : vector<1x128x384xbf16> to vector<128x384xbf16>
    %c1_16 = arith.constant 1 : index
    %c0_17 = arith.constant 0 : index
    %c0_18 = arith.constant 0 : index
    %53 = vector.load %arg2[%c1_16, %c0_17, %c0_18] : memref<2x4x128xf32, #tpu.memory_space<vmem>>, vector<1x4x128xf32>
    %54 = vector.shape_cast %53 : vector<1x4x128xf32> to vector<4x128xf32>
    %55 = vector.extract_strided_slice %52 {offsets = [0, 0], sizes = [128, 256], strides = [1, 1]} : vector<128x384xbf16> to vector<128x256xbf16>
    %cst_19 = arith.constant dense<0.000000e+00> : vector<16x256xf32>
    %56 = tpu.matmul %50, %55, %cst_19 {dimension_numbers = #tpu.dot_dimension_numbers<[1], [0], [0], [1], [0, 0, 1, 1], [], []>} : vector<16x128xbf16>, vector<128x256xbf16>, vector<16x256xf32> -> vector<16x256xf32>
    %57 = vector.extract_strided_slice %56 {offsets = [0, 0], sizes = [16, 128], strides = [1, 1]} : vector<16x256xf32> to vector<16x128xf32>
    %58 = vector.extract_strided_slice %54 {offsets = [0, 0], sizes = [1, 128], strides = [1, 1]} : vector<4x128xf32> to vector<1x128xf32>
    %59 = vector.broadcast %58 : vector<1x128xf32> to vector<16x128xf32>
    %60 = arith.addf %57, %59 : vector<16x128xf32>
    %cst_20 = arith.constant 0.000000e+00 : f32
    %61 = vector.broadcast %cst_20 : f32 to vector<16x128xf32>
    %62 = arith.maximumf %60, %61 : vector<16x128xf32>
    %63 = vector.extract_strided_slice %56 {offsets = [0, 128], sizes = [16, 128], strides = [1, 1]} : vector<16x256xf32> to vector<16x128xf32>
    %64 = arith.truncf %62 : vector<16x128xf32> to vector<16x128xbf16>
    %65 = vector.extract_strided_slice %52 {offsets = [0, 256], sizes = [128, 128], strides = [1, 1]} : vector<128x384xbf16> to vector<128x128xbf16>
    %cst_21 = arith.constant dense<0.000000e+00> : vector<16x128xf32>
    %66 = tpu.matmul %64, %65, %cst_21 {dimension_numbers = #tpu.dot_dimension_numbers<[1], [0], [0], [1], [0, 0, 1, 1], [], []>} : vector<16x128xbf16>, vector<128x128xbf16>, vector<16x128xf32> -> vector<16x128xf32>
    %67 = vector.extract_strided_slice %54 {offsets = [1, 0], sizes = [1, 128], strides = [1, 1]} : vector<4x128xf32> to vector<1x128xf32>
    %68 = vector.broadcast %67 : vector<1x128xf32> to vector<16x128xf32>
    %69 = arith.addf %66, %68 : vector<16x128xf32>
    %70 = arith.addf %69, %63 : vector<16x128xf32>
    %cst_22 = arith.constant dense<0.000000e+00> : vector<16xf32>
    %71 = vector.multi_reduction <add>, %70, %cst_22 [1] : vector<16x128xf32> to vector<16xf32>
    %72 = vector.shape_cast %71 : vector<16xf32> to vector<16x1xf32>
    %cst_23 = arith.constant 3.125000e-02 : f32
    %73 = vector.broadcast %cst_23 : f32 to vector<16x1xf32>
    %74 = arith.mulf %72, %73 : vector<16x1xf32>
    %75 = vector.broadcast %74 : vector<16x1xf32> to vector<16x128xf32>
    %76 = arith.subf %70, %75 : vector<16x128xf32>
    %77 = vector.broadcast %4 : vector<1x128xf32> to vector<16x128xf32>
    %78 = arith.mulf %76, %77 : vector<16x128xf32>
    %79 = arith.mulf %78, %78 : vector<16x128xf32>
    %cst_24 = arith.constant dense<0.000000e+00> : vector<16xf32>
    %80 = vector.multi_reduction <add>, %79, %cst_24 [1] : vector<16x128xf32> to vector<16xf32>
    %81 = vector.shape_cast %80 : vector<16xf32> to vector<16x1xf32>
    %cst_25 = arith.constant 3.125000e-02 : f32
    %82 = vector.broadcast %cst_25 : f32 to vector<16x1xf32>
    %83 = arith.mulf %81, %82 : vector<16x1xf32>
    %cst_26 = arith.constant 9.99999974E-6 : f32
    %84 = vector.broadcast %cst_26 : f32 to vector<16x1xf32>
    %85 = arith.addf %83, %84 : vector<16x1xf32>
    %86 = math.rsqrt %85 : vector<16x1xf32>
    %87 = vector.broadcast %86 : vector<16x1xf32> to vector<16x128xf32>
    %88 = arith.mulf %78, %87 : vector<16x128xf32>
    %89 = vector.extract_strided_slice %54 {offsets = [2, 0], sizes = [1, 128], strides = [1, 1]} : vector<4x128xf32> to vector<1x128xf32>
    %90 = vector.broadcast %89 : vector<1x128xf32> to vector<16x128xf32>
    %91 = arith.mulf %88, %90 : vector<16x128xf32>
    %92 = vector.extract_strided_slice %54 {offsets = [3, 0], sizes = [1, 128], strides = [1, 1]} : vector<4x128xf32> to vector<1x128xf32>
    %93 = vector.broadcast %92 : vector<1x128xf32> to vector<16x128xf32>
    %94 = arith.addf %91, %93 : vector<16x128xf32>
    %95 = arith.truncf %94 : vector<16x128xf32> to vector<16x128xbf16>
    %c0_27 = arith.constant 0 : index
    %c0_28 = arith.constant 0 : index
    %96 = vector.load %arg3[%c0_27, %c0_28] : memref<128x128xbf16, #tpu.memory_space<vmem>>, vector<128x128xbf16>
    %cst_29 = arith.constant dense<0.000000e+00> : vector<16x128xf32>
    %97 = tpu.matmul %95, %96, %cst_29 {dimension_numbers = #tpu.dot_dimension_numbers<[1], [0], [0], [1], [0, 0, 1, 1], [], []>} : vector<16x128xbf16>, vector<128x128xbf16>, vector<16x128xf32> -> vector<16x128xf32>
    %c0_30 = arith.constant 0 : index
    %c0_31 = arith.constant 0 : index
    %98 = vector.load %arg4[%c0_30, %c0_31] : memref<1x128xf32, #tpu.memory_space<vmem>>, vector<1x128xf32>
    %99 = vector.broadcast %98 : vector<1x128xf32> to vector<16x128xf32>
    %100 = arith.addf %97, %99 : vector<16x128xf32>
    %c0_32 = arith.constant 0 : index
    %c0_33 = arith.constant 0 : index
    %101 = vector.load %arg5[%c0_32, %c0_33] : memref<16x128xf32, #tpu.memory_space<vmem>>, vector<16x128xf32>
    tpu.vector_store %arg5[%c0_32, %c0_33], %100 {strides = array<i32>} : memref<16x128xf32, #tpu.memory_space<vmem>>, vector<16x128xf32>,
    return
  }
}

</mosaic_0001>

<llo_original>
// kernel: decoder_forward.1
$region0: #{decoder_forward.1}
  #allocation0 [shape = 'u32[]', space=smem, size = 0x4, offset = 0x4, fixed_abs, tag = 'smem constant byte address 0x4 - core index']
  #allocation1 [shape = 'u32[72,128]{1,0:T(1,128)}', space=vmem, size = 0x9000, scoped, tag = 'internal scratch']
  %s0 = inlined_call_operand.vmem [shape: bf16[16,128], index: 0, kind: input, shape index: {}]
  %s1 = inlined_call_operand.hbm [shape: bf16[2,128,384], index: 1, kind: input, shape index: {}]
  %s2 = inlined_call_operand.vmem [shape: f32[2,4,128], index: 2, kind: input, shape index: {}]
  %s3 = inlined_call_operand.hbm [shape: bf16[128,128], index: 3, kind: input, shape index: {}]
  %s4 = inlined_call_operand.vmem [shape: f32[1,128], index: 4, kind: input, shape index: {}]
  %s5 = inlined_call_operand.vmem [shape: f32[16,128], index: 5, kind: output, shape index: {}]
  %s6 = sld [smem:[#allocation0]]
  $region38: #{decoder_forward.1} parent=0
    _
  %s8 = ssub.s32 1, %s6
  %s9 = scalar_select 0, %s8, %s6
  $region1: #{decoder_forward.1} parent=0
    #allocation2 [shape = 'u8[196608]{0}', space=vmem, size = 0x30000, scoped, tag = 'input window, operand 1, single buffered']
    #allocation3 [shape = 's32[1]{0}', space=sflag, size = 0x4, scoped, tag = 'scoped memory for decoder_forward.1']
    #allocation4 [shape = 'u8[32768]{0}', space=vmem, size = 0x8000, scoped, tag = 'input window, operand 3, single buffered']
    #allocation5 [shape = 's32[1]{0}', space=sflag, size = 0x4, scoped, tag = 'scoped memory for decoder_forward.1']
    %10 = vsyncpa [#allocation3], 0
    %11 = vsyncpa [#allocation5], 0
    // Predicated region
    $region2: #{decoder_forward.1} parent=1 // pred_check
      _
    $region3: #{decoder_forward.1} parent=1 // pred_check_branch
      %13 = sbr.rel (0) target = $region5
    $region4: #{decoder_forward.1} parent=1 // pred_region
      _
    $region5: #{decoder_forward.1} parent=1 // pred_fallthru
      _
    // Predicated region
    $region6: #{decoder_forward.1} parent=1 // pred_check
      _
    $region7: #{decoder_forward.1} parent=1 // pred_check_branch
      %15 = sbr.rel (0) target = $region9
    $region8: #{decoder_forward.1} parent=1 // pred_region
      %17 = vsyncadd [#allocation3], 0
      %s18 = sshll.u32 %s1, 4
      %s19 = int_to_ptr.hbm [resolvable:$true] %s18
      %s20 = sshll.u32 [#allocation2], 4
      %s21 = int_to_ptr.vmem [resolvable:$true] %s20
      %26 = dma.hbm_to_vmem [thread:$0]  %s19, 6144, %s21, [#allocation3], 192, 192, 12
    $region9: #{decoder_forward.1} parent=1 // pred_fallthru
      _
    // Predicated region
    $region10: #{decoder_forward.1} parent=1 // pred_check
      _
    $region11: #{decoder_forward.1} parent=1 // pred_check_branch
      %28 = sbr.rel (0) target = $region13
    $region12: #{decoder_forward.1} parent=1 // pred_region
      _
    $region13: #{decoder_forward.1} parent=1 // pred_fallthru
      _
    // Predicated region
    $region14: #{decoder_forward.1} parent=1 // pred_check
      _
    $region15: #{decoder_forward.1} parent=1 // pred_check_branch
      %30 = sbr.rel (0) target = $region17
    $region16: #{decoder_forward.1} parent=1 // pred_region
      %32 = vsyncadd [#allocation5], 0
      %s33 = sshll.u32 %s3, 4
      %s34 = int_to_ptr.hbm [resolvable:$true] %s33
      %s35 = sshll.u32 [#allocation4], 4
      %s36 = int_to_ptr.vmem [resolvable:$true] %s35
      %41 = dma.hbm_to_vmem [thread:$0]  %s34, 1024, %s36, [#allocation5], 64, 64, 4
    $region17: #{decoder_forward.1} parent=1 // pred_fallthru
      _
    // Predicated region
    $region18: #{decoder_forward.1} parent=1 // pred_check
      _
    $region19: #{decoder_forward.1} parent=1 // pred_check_branch
      %43 = sbr.rel (0) target = $region21
    $region20: #{decoder_forward.1} parent=1 // pred_region
      _
    $region21: #{decoder_forward.1} parent=1 // pred_fallthru
      _
    // Predicated region
    $region22: #{decoder_forward.1} parent=1 // pred_check
      _
    $region23: #{decoder_forward.1} parent=1 // pred_check_branch
      %45 = sbr.rel (0) target = $region25
    $region24: #{decoder_forward.1} parent=1 // pred_region
      %47 = dma.done [#allocation3], 6144
    $region25: #{decoder_forward.1} parent=1 // pred_fallthru
      _
    // Predicated region
    $region26: #{decoder_forward.1} parent=1 // pred_check
      _
    $region27: #{decoder_forward.1} parent=1 // pred_check_branch
      %49 = sbr.rel (0) target = $region29
    $region28: #{decoder_forward.1} parent=1 // pred_region
      %51 = dma.done [#allocation5], 1024
    $region29: #{decoder_forward.1} parent=1 // pred_fallthru
      _
    %v52 = vlaneseq
    %v53 = vand.u32 %v52, 127
    %vm54 = vcmp.lt.s32.totalorder %v53, 32
    %v55 = vsel %vm54, 1, 0
    %v56 = vcvt.s32.f32 %v55
    %v57 = vld [vmem:[%s0] sm:$0xf]
    %v58 = vld [vmem:[%s0 + $0x4] sm:$0xf]
    %v59 = vld [vmem:[#allocation2] sm:$0xff]
    %v60 = vld [vmem:[#allocation2 + $0x8] sm:$0xf]
    %v61 = vld [vmem:[#allocation2 + $0xc] sm:$0xff]
    %v62 = vld [vmem:[#allocation2 + $0x14] sm:$0xf]
    %v63 = vld [vmem:[#allocation2 + $0x18] sm:$0xff]
    %v64 = vld [vmem:[#allocation2 + $0x20] sm:$0xf]
    %v65 = vld [vmem:[#allocation2 + $0x24] sm:$0xff]
    %v66 = vld [vmem:[#allocation2 + $0x2c] sm:$0xf]
    %v67 = vld [vmem:[#allocation2 + $0x30] sm:$0xff]
    %v68 = vld [vmem:[#allocation2 + $0x38] sm:$0xf]
    %v69 = vld [vmem:[#allocation2 + $0x3c] sm:$0xff]
    %v70 = vld [vmem:[#allocation2 + $0x44] sm:$0xf]
    %v71 = vld [vmem:[#allocation2 + $0x48] sm:$0xff]
    %v72 = vld [vmem:[#allocation2 + $0x50] sm:$0xf]
    %v73 = vld [vmem:[#allocation2 + $0x54] sm:$0xff]
    %v74 = vld [vmem:[#allocation2 + $0x5c] sm:$0xf]
    %v75 = vld [vmem:[#allocation2 + $0x60] sm:$0xff]
    %v76 = vld [vmem:[#allocation2 + $0x68] sm:$0xf]
    %v77 = vld [vmem:[#allocation2 + $0x6c] sm:$0xff]
    %v78 = vld [vmem:[#allocation2 + $0x74] sm:$0xf]
    %v79 = vld [vmem:[#allocation2 + $0x78] sm:$0xff]
    %v80 = vld [vmem:[#allocation2 + $0x80] sm:$0xf]
    %v81 = vld [vmem:[#allocation2 + $0x84] sm:$0xff]
    %v82 = vld [vmem:[#allocation2 + $0x8c] sm:$0xf]
    %v83 = vld [vmem:[#allocation2 + $0x90] sm:$0xff]
    %v84 = vld [vmem:[#allocation2 + $0x98] sm:$0xf]
    %v85 = vld [vmem:[#allocation2 + $0x9c] sm:$0xff]
    %v86 = vld [vmem:[#allocation2 + $0xa4] sm:$0xf]
    %v87 = vld [vmem:[#allocation2 + $0xa8] sm:$0xff]
    %v88 = vld [vmem:[#allocation2 + $0xb0] sm:$0xf]
    %v89 = vld [vmem:[#allocation2 + $0xb4] sm:$0xff]
    %v90 = vld [vmem:[#allocation2 + $0xbc] sm:$0xf]
    %v91 = vld [vmem:[%s2] sm:$0xf]
    %v94 = vunpack.c.l.b16 %v57
    %v95 = vunpack.c.l.b16 %v58
    %v96 = vpack.c.b16 %v95, %v94
    %v114 = vunpack.c.l.b16 %v59
    %v115 = vunpack.c.h.b16 %v59
    %v116 = vunpack.c.l.b16 %v61
    %v117 = vunpack.c.h.b16 %v61
    %v118 = vunpack.c.l.b16 %v63
    %v119 = vunpack.c.h.b16 %v63
    %v120 = vunpack.c.l.b16 %v65
    %v121 = vunpack.c.h.b16 %v65
    %v122 = vunpack.c.l.b16 %v67
    %v123 = vunpack.c.h.b16 %v67
    %v124 = vunpack.c.l.b16 %v69
    %v125 = vunpack.c.h.b16 %v69
    %v126 = vunpack.c.l.b16 %v71
    %v127 = vunpack.c.h.b16 %v71
    %v128 = vunpack.c.l.b16 %v73
    %v129 = vunpack.c.h.b16 %v73
    %v130 = vunpack.c.l.b16 %v75
    %v131 = vunpack.c.h.b16 %v75
    %v132 = vunpack.c.l.b16 %v77
    %v133 = vunpack.c.h.b16 %v77
    %v134 = vunpack.c.l.b16 %v79
    %v135 = vunpack.c.h.b16 %v79
    %v136 = vunpack.c.l.b16 %v81
    %v137 = vunpack.c.h.b16 %v81
    %v138 = vunpack.c.l.b16 %v83
    %v139 = vunpack.c.h.b16 %v83
    %v140 = vunpack.c.l.b16 %v85
    %v141 = vunpack.c.h.b16 %v85
    %v142 = vunpack.c.l.b16 %v87
    %v143 = vunpack.c.h.b16 %v87
    %v144 = vunpack.c.l.b16 %v89
    %v145 = vunpack.c.h.b16 %v89
    %v146 = vpack.c.b16 %v116, %v114
    %v147 = vpack.c.b16 %v117, %v115
    %v148 = vpack.c.b16 %v120, %v118
    %v149 = vpack.c.b16 %v121, %v119
    %v150 = vpack.c.b16 %v124, %v122
    %v151 = vpack.c.b16 %v125, %v123
    %v152 = vpack.c.b16 %v128, %v126
    %v153 = vpack.c.b16 %v129, %v127
    %v154 = vpack.c.b16 %v132, %v130
    %v155 = vpack.c.b16 %v133, %v131
    %v156 = vpack.c.b16 %v136, %v134
    %v157 = vpack.c.b16 %v137, %v135
    %v158 = vpack.c.b16 %v140, %v138
    %v159 = vpack.c.b16 %v141, %v139
    %v160 = vpack.c.b16 %v144, %v142
    %v161 = vpack.c.b16 %v145, %v143
    %178 = vmatpush.bf16.msra.mxu0 %v160
    %179 = vmatpush.bf16.msra.mxu0 %v158
    %180 = vmatpush.bf16.msra.mxu0 %v156
    %181 = vmatpush.bf16.msra.mxu0 %v154
    %182 = vmatpush.bf16.msra.mxu0 %v152
    %183 = vmatpush.bf16.msra.mxu0 %v150
    %184 = vmatpush.bf16.msra.mxu0 %v148
    %185 = vmatpush.bf16.msra.mxu0 %v146
    %186 = vmatmul.bf16.gmra.mxu0 %v96
    %v187 = vpop.f32.mrf.mxu0
    %v188 = vadd.f32 0.0, %v187
    %v189 = vpop.f32.mrf.mxu0
    %v190 = vadd.f32 0.0, %v189
    %191 = vdwg.mxu0
    %192 = vmatpush.bf16.msra.mxu0 %v161
    %193 = vmatpush.bf16.msra.mxu0 %v159
    %194 = vmatpush.bf16.msra.mxu0 %v157
    %195 = vmatpush.bf16.msra.mxu0 %v155
    %196 = vmatpush.bf16.msra.mxu0 %v153
    %197 = vmatpush.bf16.msra.mxu0 %v151
    %198 = vmatpush.bf16.msra.mxu0 %v149
    %199 = vmatpush.bf16.msra.mxu0 %v147
    %200 = vmatmul.bf16.gmra.mxu0 %v96
    %v201 = vpop.f32.mrf.mxu0
    %v202 = vadd.f32 0.0, %v201
    %v203 = vpop.f32.mrf.mxu0
    %v204 = vadd.f32 0.0, %v203
    %205 = vdwg.mxu0
    %v206 = vperm.slane %v91, 0
    %v207 = vadd.f32 %v188, %v206
    %v208 = vadd.f32 %v190, %v206
    %v209 = vmax.f32 %v207, 0.0
    %v210 = vmax.f32 %v208, 0.0
    %v211 = vpack.c.bf16 %v210, %v209
    %v212 = vperm.slane %v91, 1
    %v229 = vunpack.c.l.b16 %v60
    %v230 = vunpack.c.l.b16 %v62
    %v231 = vunpack.c.l.b16 %v64
    %v232 = vunpack.c.l.b16 %v66
    %v233 = vunpack.c.l.b16 %v68
    %v234 = vunpack.c.l.b16 %v70
    %v235 = vunpack.c.l.b16 %v72
    %v236 = vunpack.c.l.b16 %v74
    %v237 = vunpack.c.l.b16 %v76
    %v238 = vunpack.c.l.b16 %v78
    %v239 = vunpack.c.l.b16 %v80
    %v240 = vunpack.c.l.b16 %v82
    %v241 = vunpack.c.l.b16 %v84
    %v242 = vunpack.c.l.b16 %v86
    %v243 = vunpack.c.l.b16 %v88
    %v244 = vunpack.c.l.b16 %v90
    %v245 = vpack.c.b16 %v230, %v229
    %v246 = vpack.c.b16 %v232, %v231
    %v247 = vpack.c.b16 %v234, %v233
    %v248 = vpack.c.b16 %v236, %v235
    %v249 = vpack.c.b16 %v238, %v237
    %v250 = vpack.c.b16 %v240, %v239
    %v251 = vpack.c.b16 %v242, %v241
    %v252 = vpack.c.b16 %v244, %v243
    %261 = vmatpush.bf16.msra.mxu0 %v252
    %262 = vmatpush.bf16.msra.mxu0 %v251
    %263 = vmatpush.bf16.msra.mxu0 %v250
    %264 = vmatpush.bf16.msra.mxu0 %v249
    %265 = vmatpush.bf16.msra.mxu0 %v248
    %266 = vmatpush.bf16.msra.mxu0 %v247
    %267 = vmatpush.bf16.msra.mxu0 %v246
    %268 = vmatpush.bf16.msra.mxu0 %v245
    %269 = vmatmul.bf16.gmra.mxu0 %v211
    %v270 = vpop.f32.mrf.mxu0
    %v271 = vadd.f32 %v212, %v270
    %v272 = vpop.f32.mrf.mxu0
    %v273 = vadd.f32 %v212, %v272
    %274 = vdwg.mxu0
    %v275 = vadd.f32 %v271, %v202
    %v276 = vadd.f32 %v273, %v204
    %277 = vadd.xlane.f32.xlu0 %v275
    %v278 = vpop.xlane.xlu0 %277
    %279 = vadd.xlane.f32.xlu0 %v276
    %v280 = vpop.xlane.xlu0 %279
    %v281 = vmul.f32 %v278, 0.03125
    %v282 = vmul.f32 %v280, 0.03125
    %v283 = vsub.f32 %v275, %v281
    %v284 = vsub.f32 %v276, %v282
    %v285 = vmul.f32 %v283, %v56
    %v286 = vmul.f32 %v284, %v56
    %v287 = vmul.f32 %v285, %v285
    %v288 = vmul.f32 %v286, %v286
    %289 = vadd.xlane.f32.xlu0 %v287
    %v290 = vpop.xlane.xlu0 %289
    %291 = vadd.xlane.f32.xlu0 %v288
    %v292 = vpop.xlane.xlu0 %291
    %v293 = vmul.f32 %v290, 0.03125
    %v294 = vmul.f32 %v292, 0.03125
    %v295 = vadd.f32 %v293, 1e-05
    %v296 = vadd.f32 %v294, 1e-05
    %v297 = vrsqrt.pop %v295
    %v298 = vmul.f32 %v297, %v295
    %v299 = vmul.f32 %v298, %v297
    %v300 = vmul.f32 0.5, %v299
    %v301 = vsub.f32 1.5, %v300
    %v302 = vmul.f32 %v297, %v301
    %vm303 = vweird.f32 %v295
    %vm304 = vweird.f32 %v297
    %vm305 = vmor %vm303, %vm304
    %v306 = vsel %vm305, %v297, %v302
    %v307 = vrsqrt.pop %v296
    %v308 = vmul.f32 %v307, %v296
    %v309 = vmul.f32 %v308, %v307
    %v310 = vmul.f32 0.5, %v309
    %v311 = vsub.f32 1.5, %v310
    %v312 = vmul.f32 %v307, %v311
    %vm313 = vweird.f32 %v296
    %vm314 = vweird.f32 %v307
    %vm315 = vmor %vm313, %vm314
    %v316 = vsel %vm315, %v307, %v312
    %v317 = vmul.f32 %v285, %v306
    %v318 = vmul.f32 %v286, %v316
    %v319 = vperm.slane %v91, 2
    %v320 = vmul.f32 %v317, %v319
    %v321 = vmul.f32 %v318, %v319
    %v322 = vperm.slane %v91, 3
    %v323 = vadd.f32 %v320, %v322
    %v324 = vadd.f32 %v321, %v322
    %v325 = vpack.c.bf16 %v324, %v323
    %s326 = scalar_lea.vmem [#allocation2], 192
    %v327 = vld [vmem:[%s326] sm:$0xff]
    %v328 = vld [vmem:[%s326 + $0x8] sm:$0xf]
    %v329 = vld [vmem:[%s326 + $0xc] sm:$0xff]
    %v330 = vld [vmem:[%s326 + $0x14] sm:$0xf]
    %v331 = vld [vmem:[%s326 + $0x18] sm:$0xff]
    %v332 = vld [vmem:[%s326 + $0x20] sm:$0xf]
    %v333 = vld [vmem:[%s326 + $0x24] sm:$0xff]
    %v334 = vld [vmem:[%s326 + $0x2c] sm:$0xf]
    %v335 = vld [vmem:[%s326 + $0x30] sm:$0xff]
    %v336 = vld [vmem:[%s326 + $0x38] sm:$0xf]
    %v337 = vld [vmem:[%s326 + $0x3c] sm:$0xff]
    %v338 = vld [vmem:[%s326 + $0x44] sm:$0xf]
    %v339 = vld [vmem:[%s326 + $0x48] sm:$0xff]
    %v340 = vld [vmem:[%s326 + $0x50] sm:$0xf]
    %v341 = vld [vmem:[%s326 + $0x54] sm:$0xff]
    %v342 = vld [vmem:[%s326 + $0x5c] sm:$0xf]
    %v343 = vld [vmem:[%s326 + $0x60] sm:$0xff]
    %v344 = vld [vmem:[%s326 + $0x68] sm:$0xf]
    %v345 = vld [vmem:[%s326 + $0x6c] sm:$0xff]
    %v346 = vld [vmem:[%s326 + $0x74] sm:$0xf]
    %v347 = vld [vmem:[%s326 + $0x78] sm:$0xff]
    %v348 = vld [vmem:[%s326 + $0x80] sm:$0xf]
    %v349 = vld [vmem:[%s326 + $0x84] sm:$0xff]
    %v350 = vld [vmem:[%s326 + $0x8c] sm:$0xf]
    %v351 = vld [vmem:[%s326 + $0x90] sm:$0xff]
    %v352 = vld [vmem:[%s326 + $0x98] sm:$0xf]
    %v353 = vld [vmem:[%s326 + $0x9c] sm:$0xff]
    %v354 = vld [vmem:[%s326 + $0xa4] sm:$0xf]
    %v355 = vld [vmem:[%s326 + $0xa8] sm:$0xff]
    %v356 = vld [vmem:[%s326 + $0xb0] sm:$0xf]
    %v357 = vld [vmem:[%s326 + $0xb4] sm:$0xff]
    %v358 = vld [vmem:[%s326 + $0xbc] sm:$0xf]
    %s359 = scalar_lea.vmem %s2, 4
    %v360 = vld [vmem:[%s359] sm:$0xf]
    %v377 = vunpack.c.l.b16 %v327
    %v378 = vunpack.c.h.b16 %v327
    %v379 = vunpack.c.l.b16 %v329
    %v380 = vunpack.c.h.b16 %v329
    %v381 = vunpack.c.l.b16 %v331
    %v382 = vunpack.c.h.b16 %v331
    %v383 = vunpack.c.l.b16 %v333
    %v384 = vunpack.c.h.b16 %v333
    %v385 = vunpack.c.l.b16 %v335
    %v386 = vunpack.c.h.b16 %v335
    %v387 = vunpack.c.l.b16 %v337
    %v388 = vunpack.c.h.b16 %v337
    %v389 = vunpack.c.l.b16 %v339
    %v390 = vunpack.c.h.b16 %v339
    %v391 = vunpack.c.l.b16 %v341
    %v392 = vunpack.c.h.b16 %v341
    %v393 = vunpack.c.l.b16 %v343
    %v394 = vunpack.c.h.b16 %v343
    %v395 = vunpack.c.l.b16 %v345
    %v396 = vunpack.c.h.b16 %v345
    %v397 = vunpack.c.l.b16 %v347
    %v398 = vunpack.c.h.b16 %v347
    %v399 = vunpack.c.l.b16 %v349
    %v400 = vunpack.c.h.b16 %v349
    %v401 = vunpack.c.l.b16 %v351
    %v402 = vunpack.c.h.b16 %v351
    %v403 = vunpack.c.l.b16 %v353
    %v404 = vunpack.c.h.b16 %v353
    %v405 = vunpack.c.l.b16 %v355
    %v406 = vunpack.c.h.b16 %v355
    %v407 = vunpack.c.l.b16 %v357
    %v408 = vunpack.c.h.b16 %v357
    %v409 = vpack.c.b16 %v379, %v377
    %v410 = vpack.c.b16 %v380, %v378
    %v411 = vpack.c.b16 %v383, %v381
    %v412 = vpack.c.b16 %v384, %v382
    %v413 = vpack.c.b16 %v387, %v385
    %v414 = vpack.c.b16 %v388, %v386
    %v415 = vpack.c.b16 %v391, %v389
    %v416 = vpack.c.b16 %v392, %v390
    %v417 = vpack.c.b16 %v395, %v393
    %v418 = vpack.c.b16 %v396, %v394
    %v419 = vpack.c.b16 %v399, %v397
    %v420 = vpack.c.b16 %v400, %v398
    %v421 = vpack.c.b16 %v403, %v401
    %v422 = vpack.c.b16 %v404, %v402
    %v423 = vpack.c.b16 %v407, %v405
    %v424 = vpack.c.b16 %v408, %v406
    %441 = vmatpush.bf16.msra.mxu0 %v423
    %442 = vmatpush.bf16.msra.mxu0 %v421
    %443 = vmatpush.bf16.msra.mxu0 %v419
    %444 = vmatpush.bf16.msra.mxu0 %v417
    %445 = vmatpush.bf16.msra.mxu0 %v415
    %446 = vmatpush.bf16.msra.mxu0 %v413
    %447 = vmatpush.bf16.msra.mxu0 %v411
    %448 = vmatpush.bf16.msra.mxu0 %v409
    %449 = vmatmul.bf16.gmra.mxu0 %v325
    %v450 = vpop.f32.mrf.mxu0
    %v451 = vadd.f32 0.0, %v450
    %v452 = vpop.f32.mrf.mxu0
    %v453 = vadd.f32 0.0, %v452
    %454 = vdwg.mxu0
    %455 = vmatpush.bf16.msra.mxu0 %v424
    %456 = vmatpush.bf16.msra.mxu0 %v422
    %457 = vmatpush.bf16.msra.mxu0 %v420
    %458 = vmatpush.bf16.msra.mxu0 %v418
    %459 = vmatpush.bf16.msra.mxu0 %v416
    %460 = vmatpush.bf16.msra.mxu0 %v414
    %461 = vmatpush.bf16.msra.mxu0 %v412
    %462 = vmatpush.bf16.msra.mxu0 %v410
    %463 = vmatmul.bf16.gmra.mxu0 %v325
    %v464 = vpop.f32.mrf.mxu0
    %v465 = vadd.f32 0.0, %v464
    %v466 = vpop.f32.mrf.mxu0
    %v467 = vadd.f32 0.0, %v466
    %468 = vdwg.mxu0
    %v469 = vperm.slane %v360, 0
    %v470 = vadd.f32 %v451, %v469
    %v471 = vadd.f32 %v453, %v469
    %v472 = vmax.f32 %v470, 0.0
    %v473 = vmax.f32 %v471, 0.0
    %v474 = vpack.c.bf16 %v473, %v472
    %v475 = vperm.slane %v360, 1
    %v492 = vunpack.c.l.b16 %v328
    %v493 = vunpack.c.l.b16 %v330
    %v494 = vunpack.c.l.b16 %v332
    %v495 = vunpack.c.l.b16 %v334
    %v496 = vunpack.c.l.b16 %v336
    %v497 = vunpack.c.l.b16 %v338
    %v498 = vunpack.c.l.b16 %v340
    %v499 = vunpack.c.l.b16 %v342
    %v500 = vunpack.c.l.b16 %v344
    %v501 = vunpack.c.l.b16 %v346
    %v502 = vunpack.c.l.b16 %v348
    %v503 = vunpack.c.l.b16 %v350
    %v504 = vunpack.c.l.b16 %v352
    %v505 = vunpack.c.l.b16 %v354
    %v506 = vunpack.c.l.b16 %v356
    %v507 = vunpack.c.l.b16 %v358
    %v508 = vpack.c.b16 %v493, %v492
    %v509 = vpack.c.b16 %v495, %v494
    %v510 = vpack.c.b16 %v497, %v496
    %v511 = vpack.c.b16 %v499, %v498
    %v512 = vpack.c.b16 %v501, %v500
    %v513 = vpack.c.b16 %v503, %v502
    %v514 = vpack.c.b16 %v505, %v504
    %v515 = vpack.c.b16 %v507, %v506
    %524 = vmatpush.bf16.msra.mxu0 %v515
    %525 = vmatpush.bf16.msra.mxu0 %v514
    %526 = vmatpush.bf16.msra.mxu0 %v513
    %527 = vmatpush.bf16.msra.mxu0 %v512
    %528 = vmatpush.bf16.msra.mxu0 %v511
    %529 = vmatpush.bf16.msra.mxu0 %v510
    %530 = vmatpush.bf16.msra.mxu0 %v509
    %531 = vmatpush.bf16.msra.mxu0 %v508
    %532 = vmatmul.bf16.gmra.mxu0 %v474
    %v533 = vpop.f32.mrf.mxu0
    %v534 = vadd.f32 %v475, %v533
    %v535 = vpop.f32.mrf.mxu0
    %v536 = vadd.f32 %v475, %v535
    %537 = vdwg.mxu0
    %v538 = vadd.f32 %v534, %v465
    %v539 = vadd.f32 %v536, %v467
    %540 = vadd.xlane.f32.xlu0 %v538
    %v541 = vpop.xlane.xlu0 %540
    %542 = vadd.xlane.f32.xlu0 %v539
    %v543 = vpop.xlane.xlu0 %542
    %v544 = vmul.f32 %v541, 0.03125
    %v545 = vmul.f32 %v543, 0.03125
    %v546 = vsub.f32 %v538, %v544
    %v547 = vsub.f32 %v539, %v545
    %v548 = vmul.f32 %v546, %v56
    %v549 = vmul.f32 %v547, %v56
    %v550 = vmul.f32 %v548, %v548
    %v551 = vmul.f32 %v549, %v549
    %552 = vadd.xlane.f32.xlu0 %v550
    %v553 = vpop.xlane.xlu0 %552
    %554 = vadd.xlane.f32.xlu0 %v551
    %v555 = vpop.xlane.xlu0 %554
    %v556 = vmul.f32 %v553, 0.03125
    %v557 = vmul.f32 %v555, 0.03125
    %v558 = vadd.f32 %v556, 1e-05
    %v559 = vadd.f32 %v557, 1e-05
    %v560 = vrsqrt.pop %v558
    %v561 = vmul.f32 %v560, %v558
    %v562 = vmul.f32 %v561, %v560
    %v563 = vmul.f32 0.5, %v562
    %v564 = vsub.f32 1.5, %v563
    %v565 = vmul.f32 %v560, %v564
    %vm566 = vweird.f32 %v558
    %vm567 = vweird.f32 %v560
    %vm568 = vmor %vm566, %vm567
    %v569 = vsel %vm568, %v560, %v565
    %v570 = vrsqrt.pop %v559
    %v571 = vmul.f32 %v570, %v559
    %v572 = vmul.f32 %v571, %v570
    %v573 = vmul.f32 0.5, %v572
    %v574 = vsub.f32 1.5, %v573
    %v575 = vmul.f32 %v570, %v574
    %vm576 = vweird.f32 %v559
    %vm577 = vweird.f32 %v570
    %vm578 = vmor %vm576, %vm577
    %v579 = vsel %vm578, %v570, %v575
    %v580 = vmul.f32 %v548, %v569
    %v581 = vmul.f32 %v549, %v579
    %v582 = vperm.slane %v360, 2
    %v583 = vmul.f32 %v580, %v582
    %v584 = vmul.f32 %v581, %v582
    %v585 = vperm.slane %v360, 3
    %v586 = vadd.f32 %v583, %v585
    %v587 = vadd.f32 %v584, %v585
    %v588 = vpack.c.bf16 %v587, %v586
    %v589 = vld [vmem:[#allocation4] sm:$0xf]
    %v590 = vld [vmem:[#allocation4 + $0x4] sm:$0xf]
    %v591 = vld [vmem:[#allocation4 + $0x8] sm:$0xf]
    %v592 = vld [vmem:[#allocation4 + $0xc] sm:$0xf]
    %v593 = vld [vmem:[#allocation4 + $0x10] sm:$0xf]
    %v594 = vld [vmem:[#allocation4 + $0x14] sm:$0xf]
    %v595 = vld [vmem:[#allocation4 + $0x18] sm:$0xf]
    %v596 = vld [vmem:[#allocation4 + $0x1c] sm:$0xf]
    %v597 = vld [vmem:[#allocation4 + $0x20] sm:$0xf]
    %v598 = vld [vmem:[#allocation4 + $0x24] sm:$0xf]
    %v599 = vld [vmem:[#allocation4 + $0x28] sm:$0xf]
    %v600 = vld [vmem:[#allocation4 + $0x2c] sm:$0xf]
    %v601 = vld [vmem:[#allocation4 + $0x30] sm:$0xf]
    %v602 = vld [vmem:[#allocation4 + $0x34] sm:$0xf]
    %v603 = vld [vmem:[#allocation4 + $0x38] sm:$0xf]
    %v604 = vld [vmem:[#allocation4 + $0x3c] sm:$0xf]
    %v605 = vld [vmem:[%s4] sm:$0x1]
    %v607 = vperm.slane %v605, 0
    %v625 = vunpack.c.l.b16 %v589
    %v626 = vunpack.c.l.b16 %v590
    %v627 = vunpack.c.l.b16 %v591
    %v628 = vunpack.c.l.b16 %v592
    %v629 = vunpack.c.l.b16 %v593
    %v630 = vunpack.c.l.b16 %v594
    %v631 = vunpack.c.l.b16 %v595
    %v632 = vunpack.c.l.b16 %v596
    %v633 = vunpack.c.l.b16 %v597
    %v634 = vunpack.c.l.b16 %v598
    %v635 = vunpack.c.l.b16 %v599
    %v636 = vunpack.c.l.b16 %v600
    %v637 = vunpack.c.l.b16 %v601
    %v638 = vunpack.c.l.b16 %v602
    %v639 = vunpack.c.l.b16 %v603
    %v640 = vunpack.c.l.b16 %v604
    %v641 = vpack.c.b16 %v626, %v625
    %v642 = vpack.c.b16 %v628, %v627
    %v643 = vpack.c.b16 %v630, %v629
    %v644 = vpack.c.b16 %v632, %v631
    %v645 = vpack.c.b16 %v634, %v633
    %v646 = vpack.c.b16 %v636, %v635
    %v647 = vpack.c.b16 %v638, %v637
    %v648 = vpack.c.b16 %v640, %v639
    %657 = vmatpush.bf16.msra.mxu0 %v648
    %658 = vmatpush.bf16.msra.mxu0 %v647
    %659 = vmatpush.bf16.msra.mxu0 %v646
    %660 = vmatpush.bf16.msra.mxu0 %v645
    %661 = vmatpush.bf16.msra.mxu0 %v644
    %662 = vmatpush.bf16.msra.mxu0 %v643
    %663 = vmatpush.bf16.msra.mxu0 %v642
    %664 = vmatpush.bf16.msra.mxu0 %v641
    %665 = vmatmul.bf16.gmra.mxu0 %v588
    %v666 = vpop.f32.mrf.mxu0
    %v667 = vadd.f32 %v607, %v666
    %v668 = vpop.f32.mrf.mxu0
    %v669 = vadd.f32 %v607, %v668
    %670 = vdwg.mxu0
    %671 = vst [vmem:[%s5] sm:$0xff] %v667
    %672 = vst [vmem:[%s5 + $0x8] sm:$0xff] %v669
    // Predicated region
    $region30: #{decoder_forward.1} parent=1 // pred_check
      _
    $region31: #{decoder_forward.1} parent=1 // pred_check_branch
      %674 = sbr.rel (0) target = $region33
    $region32: #{decoder_forward.1} parent=1 // pred_region
      _
    $region33: #{decoder_forward.1} parent=1 // pred_fallthru
      _
    // Predicated region
    $region34: #{decoder_forward.1} parent=1 // pred_check
      _
    $region35: #{decoder_forward.1} parent=1 // pred_check_branch
      %676 = sbr.rel (0) target = $region37
    $region36: #{decoder_forward.1} parent=1 // pred_region
      _
    $region37: #{decoder_forward.1} parent=1 // pred_fallthru
      _
    %677 = vsyncpa [#allocation3], 1
    %678 = vsyncpa [#allocation5], 1

</llo_original>
